<compile_context>
chip_gen: v5e
topology: v5e:2x2
jax: 0.10.0
libtpu: 0.0.40
codegen_flags: <defaults>
</compile_context>

<pallas_src>
import functools

import jax
import jax.numpy as jnp
from jax.experimental import pallas as pl
from jax.experimental.pallas import tpu as pltpu


# Leave headroom under v7x's 64 MiB physical VMEM (also fine on v5e/v6e).
_VMEM_LIMIT_BYTES = 48 * 1024 * 1024


def _choose_tile(n, target):
    """Largest multiple of 128 <= target that divides n; else fall back to n."""
    if n <= target:
        return n
    t = (target // 128) * 128
    while t >= 128:
        if n % t == 0:
            return t
        t -= 128
    # TODO(synk): for n not a multiple of 128, pad the adjacency up to a
    # multiple of 128 instead of falling back to a single full-array block.
    return n


# ----------------------------------------------------------------------------
# forward(): return the parameter (no copy kernel — pure overhead otherwise)
# ----------------------------------------------------------------------------
def estimate_adj_forward(estimated_adj):
    return estimated_adj


# ----------------------------------------------------------------------------
# pass 1: r_inv = guard(rsqrt(rowsum(A [+ A^T]) + 1))     -> shape (n, 1)
# ----------------------------------------------------------------------------
def _rowsum_body(a, a_t, rinv_ref):
    k = pl.program_id(1)
    partial = jnp.sum(a.astype(jnp.float32), axis=1, keepdims=True)      # (tm, 1)
    if a_t is not None:
        # rowsum(A + A^T): mirrored tile contributes its transposed row sums.
        partial = partial + jnp.sum(a_t.astype(jnp.float32).T, axis=1, keepdims=True)

    @pl.when(k == 0)
    def _():
        # fold the +I into the rowsum: rowsum(A + I) = rowsum(A) + 1
        rinv_ref[...] = partial + jnp.float32(1.0)

    @pl.when(k > 0)
    def _():
        rinv_ref[...] = rinv_ref[...] + partial

    @pl.when(k == pl.num_programs(1) - 1)
    def _():
        rs = rinv_ref[...]
        # single EUP rsqrt instead of pow(x, -0.5) (log+mul+exp chain).
        r = jax.lax.rsqrt(rs)
        # match torch: rowsum==0 -> inf -> zeroed; negative rowsum -> NaN kept.
        rinv_ref[...] = jnp.where(jnp.isinf(r), jnp.float32(0.0), r)


def _rowsum_kernel_asym(adj_ref, rinv_ref):
    _rowsum_body(adj_ref[...], None, rinv_ref)


def _rowsum_kernel_sym(adj_ref, adjt_ref, rinv_ref):
    _rowsum_body(adj_ref[...], adjt_ref[...], rinv_ref)


# ----------------------------------------------------------------------------
# pass 2: out[i,j] tile = r_row * (A [+A^T] + I) * r_col   (lane-dense tiles)
# ----------------------------------------------------------------------------
def _scale_body(a, a_t, rrow_ref, rcol_ref, out_ref, *, tm, tn):
    i = pl.program_id(0)
    j = pl.program_id(1)
    a = a.astype(jnp.float32)
    if a_t is not None:
        a = a + a_t.astype(jnp.float32).T
    # +I with a single select on the global row==col mask (no dense eye temp).
    rows = jax.lax.broadcasted_iota(jnp.int32, (tm, tn), 0) + i * tm
    cols = jax.lax.broadcasted_iota(jnp.int32, (tm, tn), 1) + j * tn
    a = jnp.where(rows == cols, a + jnp.float32(1.0), a)
    # diag(r) @ M @ diag(r)  ==  row-scale then col-scale (exact)
    out_ref[...] = (a * rrow_ref[...]) * rcol_ref[...]


def _scale_kernel_asym(adj_ref, rrow_ref, rcol_ref, out_ref, *, tm, tn):
    _scale_body(adj_ref[...], None, rrow_ref, rcol_ref, out_ref, tm=tm, tn=tn)


def _scale_kernel_sym(adj_ref, adjt_ref, rrow_ref, rcol_ref, out_ref, *, tm, tn):
    _scale_body(adj_ref[...], adjt_ref[...], rrow_ref, rcol_ref, out_ref, tm=tm, tn=tn)


# ----------------------------------------------------------------------------
# wrapper
# ----------------------------------------------------------------------------
def estimate_adj_normalize(estimated_adj, symmetric=False, *,
                           tm=256, tk=2048, tn=2048):
    """D^{-1/2} (A [+ A^T] + I) D^{-1/2}, tiled two-pass Pallas implementation."""
    n = estimated_adj.shape[0]
    tm = _choose_tile(n, tm)
    tk = _choose_tile(n, tk)
    tn = _choose_tile(n, tn)

    cp = pltpu.CompilerParams(
        dimension_semantics=("parallel", "arbitrary"),
        vmem_limit_bytes=_VMEM_LIMIT_BYTES,
    )

    # ----- pass 1: r_inv (n, 1) -----
    in_specs1 = [pl.BlockSpec((tm, tk), lambda i, k: (i, k))]
    operands1 = [estimated_adj]
    kernel1 = _rowsum_kernel_asym
    if symmetric:
        # same array, swapped index_map -> mirrored tile (no global transpose)
        in_specs1.append(pl.BlockSpec((tk, tm), lambda i, k: (k, i)))
        operands1.append(estimated_adj)
        kernel1 = _rowsum_kernel_sym

    r_inv = pl.pallas_call(
        kernel1,
        out_shape=jax.ShapeDtypeStruct((n, 1), jnp.float32),
        grid=(n // tm, n // tk),
        in_specs=in_specs1,
        out_specs=pl.BlockSpec((tm, 1), lambda i, k: (i, 0)),
        compiler_params=cp,
    )(*operands1)

    # One-time O(n) lane-major copy of r_inv, hoisted out of the tiled
    # scaling loop (pass 2 loads its column slice as a (1, tn) lane vector).
    r_col = r_inv.reshape(1, n)

    # ----- pass 2: scaled output (n, n) -----
    in_specs2 = [pl.BlockSpec((tm, tn), lambda i, j: (i, j))]
    operands2 = [estimated_adj]
    if symmetric:
        in_specs2.append(pl.BlockSpec((tn, tm), lambda i, j: (j, i)))
        operands2.append(estimated_adj)
        kernel2 = functools.partial(_scale_kernel_sym, tm=tm, tn=tn)
    else:
        kernel2 = functools.partial(_scale_kernel_asym, tm=tm, tn=tn)
    in_specs2 += [
        pl.BlockSpec((tm, 1), lambda i, j: (i, 0)),   # r_inv row slice
        pl.BlockSpec((1, tn), lambda i, j: (0, j)),   # r_inv col slice (lane-major)
    ]
    operands2 += [r_inv, r_col]

    return pl.pallas_call(
        kernel2,
        out_shape=jax.ShapeDtypeStruct((n, n), jnp.float32),
        grid=(n // tm, n // tn),
        in_specs=in_specs2,
        out_specs=pl.BlockSpec((tm, tn), lambda i, j: (i, j)),
        compiler_params=cp,
    )(*operands2)


# ----------------------------------------------------------------------------
# Module-like wrapper
# ----------------------------------------------------------------------------
class EstimateAdjPallas:
    """JAX/Pallas port of ProGNN EstimateAdj."""

    def __init__(self, adj, symmetric=False):
        # nn.Parameter(torch.FloatTensor(n, n)) initialized by copying `adj`
        self.estimated_adj = jnp.asarray(adj, dtype=jnp.float32)
        self.symmetric = symmetric

    def __call__(self):
        return estimate_adj_forward(self.estimated_adj)

    def normalize(self, **tile_kwargs):
        return estimate_adj_normalize(self.estimated_adj, self.symmetric,
                                      **tile_kwargs)


# ----------------------------------------------------------------------------
# Reference (plain JAX) for verification
# ----------------------------------------------------------------------------
def _normalize_ref(adj, symmetric):
    a = adj.astype(jnp.float32)
    if symmetric:
        a = a + a.T
    mx = a + jnp.eye(a.shape[0], dtype=jnp.float32)
    rowsum = mx.sum(1)
    r_inv = jnp.power(rowsum, -0.5)
    r_inv = jnp.where(jnp.isinf(r_inv), 0.0, r_inv)
    r_mat_inv = jnp.diag(r_inv)
    return r_mat_inv @ mx @ r_mat_inv


if __name__ == "__main__":
    n = 256  # small, lane-aligned graph
    key = jax.random.PRNGKey(0)
    probs = jax.random.uniform(key, (n, n), dtype=jnp.float32)
    adj = (probs < 0.05).astype(jnp.float32)
    adj = jnp.maximum(adj, adj.T)  # typical symmetric 0/1 adjacency

    model = EstimateAdjPallas(adj, symmetric=False)

    # forward(): returns the parameter
    out_fwd = jax.block_until_ready(model())
    assert out_fwd.shape == (n, n) and out_fwd.dtype == jnp.float32
    assert bool(jnp.allclose(out_fwd, model.estimated_adj))

    # normalize(): D^{-1/2}(A [+A^T] + I)D^{-1/2}, both symmetric settings,
    # with small explicit tiles (exercises the 2x2 grid / accumulator path)
    # and with default tiles.
    for symmetric in (False, True):
        ref = _normalize_ref(adj, symmetric)
        out_tiled = jax.block_until_ready(
            estimate_adj_normalize(adj, symmetric, tm=128, tk=128, tn=128))
        assert bool(jnp.allclose(out_tiled, ref, rtol=1e-5, atol=1e-5)), symmetric
        out_default = jax.block_until_ready(
            estimate_adj_normalize(adj, symmetric))
        assert bool(jnp.allclose(out_default, ref, rtol=1e-5, atol=1e-5)), symmetric

    # bf16 parameter path: cast happens inside the kernel (no f32 HBM copy).
    adj_bf16 = adj.astype(jnp.bfloat16)
    out_bf = jax.block_until_ready(
        estimate_adj_normalize(adj_bf16, False, tm=128, tk=128, tn=128))
    ref_bf = _normalize_ref(adj_bf16.astype(jnp.float32), False)
    assert bool(jnp.allclose(out_bf, ref_bf, rtol=1e-2, atol=1e-2))

    print("KERNEL_OK")
</pallas_src>

<mosaic_0001>
module attributes {stable_mosaic.version = 11 : i64} {
  func.func @_rowsum_kernel_asym(%arg0: i32, %arg1: i32, %arg2: memref<128x128xf32, #tpu.memory_space<vmem>>, %arg3: memref<128x1xf32, #tpu.memory_space<vmem>>) attributes {dimension_semantics = [#tpu.dimension_semantics<parallel>, #tpu.dimension_semantics<arbitrary>], iteration_bounds = array<i64: 2, 2>, scalar_prefetch = 0 : i64, scratch_operands = 0 : i64, tpu.core_type = #tpu.core_type<tc>, window_params = [{transform_indices = @transform_0, window_bounds = array<i64: 128, 128>}, {transform_indices = @transform_1, window_bounds = array<i64: 128, 1>}]} {
    %c0 = arith.constant 0 : index
    %c0_0 = arith.constant 0 : index
    %0 = vector.load %arg2[%c0, %c0_0] : memref<128x128xf32, #tpu.memory_space<vmem>>, vector<128x128xf32>
    %cst = arith.constant dense<0.000000e+00> : vector<128xf32>
    %1 = vector.multi_reduction <add>, %0, %cst [1] : vector<128x128xf32> to vector<128xf32>
    %2 = vector.shape_cast %1 : vector<128xf32> to vector<128x1xf32>
    %c0_i32 = arith.constant 0 : i32
    %3 = arith.cmpi eq, %arg1, %c0_i32 : i32
    %4 = arith.extui %3 : i1 to i32
    %c0_i32_1 = arith.constant 0 : i32
    %5 = arith.cmpi ne, %4, %c0_i32_1 : i32
    scf.if %5 {
      %cst_5 = arith.constant 1.000000e+00 : f32
      %12 = vector.broadcast %cst_5 : f32 to vector<128x1xf32>
      %13 = arith.addf %2, %12 : vector<128x1xf32>
      %c0_6 = arith.constant 0 : index
      %c0_7 = arith.constant 0 : index
      %14 = vector.load %arg3[%c0_6, %c0_7] : memref<128x1xf32, #tpu.memory_space<vmem>>, vector<128x1xf32>
      tpu.vector_store %arg3[%c0_6, %c0_7], %13 {strides = array<i32>} : memref<128x1xf32, #tpu.memory_space<vmem>>, vector<128x1xf32>,
    } else {
    }
    %c0_i32_2 = arith.constant 0 : i32
    %6 = arith.cmpi sgt, %arg1, %c0_i32_2 : i32
    %7 = arith.extui %6 : i1 to i32
    %c0_i32_3 = arith.constant 0 : i32
    %8 = arith.cmpi ne, %7, %c0_i32_3 : i32
    scf.if %8 {
      %c0_5 = arith.constant 0 : index
      %c0_6 = arith.constant 0 : index
      %12 = vector.load %arg3[%c0_5, %c0_6] : memref<128x1xf32, #tpu.memory_space<vmem>>, vector<128x1xf32>
      %13 = arith.addf %12, %2 : vector<128x1xf32>
      %c0_7 = arith.constant 0 : index
      %c0_8 = arith.constant 0 : index
      %14 = vector.load %arg3[%c0_7, %c0_8] : memref<128x1xf32, #tpu.memory_space<vmem>>, vector<128x1xf32>
      tpu.vector_store %arg3[%c0_7, %c0_8], %13 {strides = array<i32>} : memref<128x1xf32, #tpu.memory_space<vmem>>, vector<128x1xf32>,
    } else {
    }
    %c1_i32 = arith.constant 1 : i32
    %9 = arith.cmpi eq, %arg1, %c1_i32 : i32
    %10 = arith.extui %9 : i1 to i32
    %c0_i32_4 = arith.constant 0 : i32
    %11 = arith.cmpi ne, %10, %c0_i32_4 : i32
    scf.if %11 {
      %c0_5 = arith.constant 0 : index
      %c0_6 = arith.constant 0 : index
      %12 = vector.load %arg3[%c0_5, %c0_6] : memref<128x1xf32, #tpu.memory_space<vmem>>, vector<128x1xf32>
      %13 = math.rsqrt %12 : vector<128x1xf32>
      %14 = math.absf %13 : vector<128x1xf32>
      %cst_7 = arith.constant 0x7F800000 : f32
      %15 = vector.broadcast %cst_7 : f32 to vector<128x1xf32>
      %16 = arith.cmpf oeq, %14, %15 : vector<128x1xf32>
      %cst_8 = arith.constant 0.000000e+00 : f32
      %17 = vector.broadcast %cst_8 : f32 to vector<128x1xf32>
      %18 = arith.select %16, %17, %13 : vector<128x1xi1>, vector<128x1xf32>
      %c0_9 = arith.constant 0 : index
      %c0_10 = arith.constant 0 : index
      %19 = vector.load %arg3[%c0_9, %c0_10] : memref<128x1xf32, #tpu.memory_space<vmem>>, vector<128x1xf32>
      tpu.vector_store %arg3[%c0_9, %c0_10], %18 {strides = array<i32>} : memref<128x1xf32, #tpu.memory_space<vmem>>, vector<128x1xf32>,
    } else {
    }
    return
  }
  func.func @transform_0(%arg0: i32, %arg1: i32) -> (i32, i32) {
    %c0_i32 = arith.constant 0 : i32
    return %arg0, %arg1 : i32, i32
  }
  func.func @transform_1(%arg0: i32, %arg1: i32) -> (i32, i32) {
    %c0_i32 = arith.constant 0 : i32
    %c0_i32_0 = arith.constant 0 : i32
    return %arg0, %c0_i32 : i32, i32
  }
}

</mosaic_0001>

<llo_original>
// kernel: tpu_custom_call.1
$region0: #{tpu_custom_call.1}
  #allocation0 [shape = 'u32[]', space=smem, size = 0x4, offset = 0x4, fixed_abs, tag = 'smem constant byte address 0x4 - core index']
  #allocation1 [shape = 'u32[72,128]{1,0:T(1,128)}', space=vmem, size = 0x9000, scoped, tag = 'internal scratch']
  %s0 = inlined_call_operand.hbm [shape: f32[256,256], index: 0, kind: input, shape index: {}]
  %s1 = inlined_call_operand.vmem [shape: f32[256,1], index: 1, kind: output, shape index: {}]
  %s2 = sld [smem:[#allocation0]]
  $region53: #{tpu_custom_call.1} parent=0
    _
  %s4 = ssub.s32 1, %s2
  %s5 = scalar_select 0, %s4, %s2
  $region1: #{tpu_custom_call.1} parent=0
    #allocation2 [shape = 'u8[131072]{0}', space=vmem, size = 0x20000, scoped, tag = 'input window, operand 0']
    #allocation3 [shape = 's32[2]{0}', space=sflag, size = 0x8, scoped, tag = 'scoped memory for tpu_custom_call.1']
    %6 = vsyncpa [#allocation3], 0
    %s7 = scalar_lea.sflag [#allocation3], 1
    %8 = vsyncpa %s7, 0
    loop: start=0, step=1, limit=6
    $region2: #{tpu_custom_call.1} parent=1 // loop_pre_header
      _
    $region3: #{tpu_custom_call.1} parent=1 // loop_header
      %s10 = sphi 0, %s14
      %p11 = scmp.ge.s32.totalorder %s10, 6
      %s17 = sphi 0, %s29
      %s18 = sphi 0, %s25
      %s19 = sphi 0, %s17
      %s20 = sphi 0, %s18
      %s21 = sphi 0, %s19
      %s22 = sphi 0, %s20
      %s34 = sphi 0, %s36
      %s37 = sphi 0, %s34
      %s38 = sphi 0, %s37
      %s54 = sphi 0, %s38
      %s60 = sphi 0, %s62
      %s63 = sphi 0, %s60
      %s64 = sphi 0, %s63
      %s80 = sphi 0, %s64
    $region4: #{tpu_custom_call.1} parent=1 // loop_header_branch
      %13 = sbr.rel (%p11) target = $region8
    $region5: #{tpu_custom_call.1} parent=1 // loop_body
      %s15 = ssub.s32 %s10, 1
      %s16 = ssub.s32 %s10, 2
      %s23 = sadd.s32 1, %s18
      %p24 = scmp.ge.s32.totalorder %s23, 2
      %s25 = scalar_select %p24, 0, %s23
      %s26 = sadd.s32 1, %s17
      %s27 = scalar_select %p24, %s26, %s17
      %p28 = scmp.ge.s32.totalorder %s27, 2
      %s29 = scalar_select %p28, 0, %s27
      %s30 = ssub.s32 %s17, %s29
      %s31 = ssub.s32 %s18, %s25
      %s32 = sor.u32 %s30, %s31
      %p33 = scmp.eq.s32.totalorder %s32, 0
      %s35 = sadd.s32 %s34, 1
      %s36 = scalar_select %p33, %s34, %s35
      %p39 = pneg %p33
      %p40 = scmp.eq.s32.totalorder %s10, 3
      %p41 = por %p39, %p40
      %p42 = scmp.ne.s32.totalorder %s34, %s37
      %p43 = scmp.eq.s32.totalorder %s10, 0
      %p44 = por %p42, %p43
      %p45 = scmp.ne.s32.totalorder %s34, %s37
      %p46 = scmp.eq.s32.totalorder %s15, 3
      %p47 = por %p45, %p46
      %p48 = scmp.ne.s32.totalorder %s37, %s38
      %p49 = scmp.eq.s32.totalorder %s15, 0
      %p50 = por %p48, %p49
      %p51 = scmp.ne.s32.totalorder %s37, %s38
      %p52 = scmp.eq.s32.totalorder %s16, 3
      %p53 = por %p51, %p52
      %p55 = scmp.ne.s32.totalorder %s38, %s54
      %p56 = scmp.eq.s32.totalorder %s16, 0
      %p57 = por %p55, %p56
      %s58 = ssub.s32 %s17, %s29
      %p59 = scmp.eq.s32.totalorder %s58, 0
      %s61 = sadd.s32 %s60, 1
      %s62 = scalar_select %p59, %s60, %s61
      %p65 = pneg %p59
      %p66 = scmp.eq.s32.totalorder %s10, 3
      %p67 = por %p65, %p66
      %p68 = scmp.ne.s32.totalorder %s60, %s63
      %p69 = scmp.eq.s32.totalorder %s10, 0
      %p70 = por %p68, %p69
      %p71 = scmp.ne.s32.totalorder %s60, %s63
      %p72 = scmp.eq.s32.totalorder %s15, 3
      %p73 = por %p71, %p72
      %p74 = scmp.ne.s32.totalorder %s63, %s64
      %p75 = scmp.eq.s32.totalorder %s15, 0
      %p76 = por %p74, %p75
      %p77 = scmp.ne.s32.totalorder %s63, %s64
      %p78 = scmp.eq.s32.totalorder %s16, 3
      %p79 = por %p77, %p78
      %p81 = scmp.ne.s32.totalorder %s64, %s80
      %p82 = scmp.eq.s32.totalorder %s16, 0
      %p83 = por %p81, %p82
      %p84 = scmp.le.s32.totalorder 1, %s10
      %p85 = scmp.lt.s32.totalorder %s10, 5
      %p86 = pnand %p84, %p85
      %p87 = pneg %p86
      // Predicated region
      $region9: #{tpu_custom_call.1} parent=5 // pred_check
        _
      $region10: #{tpu_custom_call.1} parent=5 // pred_check_branch
        %89 = sbr.rel (%p86) target = $region12
      $region11: #{tpu_custom_call.1} parent=5 // pred_region
        %s90 = ssub.s32 %s10, 1
      $region12: #{tpu_custom_call.1} parent=5 // pred_fallthru
        _
      %p91 = scmp.lt.s32.totalorder %s10, 4
      // Predicated region
      $region13: #{tpu_custom_call.1} parent=5 // pred_check
        %p92 = pneg %p91
      $region14: #{tpu_custom_call.1} parent=5 // pred_check_branch
        %94 = sbr.rel (%p92) target = $region16
      $region15: #{tpu_custom_call.1} parent=5 // pred_region
        // Predicated region
        $region17: #{tpu_custom_call.1} parent=15 // pred_check
          %p95 = pneg %p44
        $region18: #{tpu_custom_call.1} parent=15 // pred_check_branch
          %97 = sbr.rel (%p95) target = $region20
        $region19: #{tpu_custom_call.1} parent=15 // pred_region
          %s98 = sand.u32 %s34, 1
          %s99 = scalar_lea.sflag [#allocation3], %s98
          %s100 = sand.u32 %s34, 1
          %s101 = smul.addr %s100, 128
          %s102 = scalar_lea.vmem [#allocation2], %s101
          %s103 = smul.u32 16, %s17
          %105 = vsyncadd %s99, 0
          %s106 = smul.addr %s103, 2
          %s107 = sadd.s32 %s18, %s106
          %s108 = smul.addr %s107, 8
          %s109 = scalar_lea.hbm %s0, %s108
          %s110 = sshll.u32 %s109, 4
          %s111 = int_to_ptr.hbm [resolvable:$true] %s110
          %s112 = sshll.u32 %s102, 4
          %s113 = int_to_ptr.vmem [resolvable:$true] %s112
          %118 = dma.hbm_to_vmem [thread:$0]  %s111, 2048, %s113, %s99, 256, 128, 8
        $region20: #{tpu_custom_call.1} parent=15 // pred_fallthru
          _
      $region16: #{tpu_custom_call.1} parent=5 // pred_fallthru
        _
      %p119 = scmp.le.s32.totalorder 1, %s10
      %p120 = scmp.lt.s32.totalorder %s10, 5
      %p121 = pnand %p119, %p120
      %p122 = pneg %p121
      // Predicated region
      $region21: #{tpu_custom_call.1} parent=5 // pred_check
        _
      $region22: #{tpu_custom_call.1} parent=5 // pred_check_branch
        %124 = sbr.rel (%p121) target = $region24
      $region23: #{tpu_custom_call.1} parent=5 // pred_region
        %s125 = ssub.s32 %s10, 1
        %s126 = sand.u32 %s37, 1
        %s127 = scalar_lea.sflag [#allocation3], %s126
        %s128 = sand.u32 %s37, 1
        %s129 = smul.addr %s128, 128
        %s130 = scalar_lea.vmem [#allocation2], %s129
        // Predicated region
        $region25: #{tpu_custom_call.1} parent=23 // pred_check
          %p131 = pneg %p50
        $region26: #{tpu_custom_call.1} parent=23 // pred_check_branch
          %133 = sbr.rel (%p131) target = $region28
        $region27: #{tpu_custom_call.1} parent=23 // pred_region
          %135 = dma.done %s127, 2048
        $region28: #{tpu_custom_call.1} parent=23 // pred_fallthru
          _
        %s136 = sand.u32 %s37, 1
        %s137 = scalar_lea.sflag [#allocation3], %s136
        %s138 = sand.u32 %s37, 1
        %s139 = smul.addr %s138, 128
        %s140 = scalar_lea.vmem [#allocation2], %s139
        %p141 = pneg %p50
        %p142 = pneg %p47
        %p143 = pneg %p76
        %p144 = pneg %p73
        %s145 = smul.u32 16, %s19
        %p146 = scmp.lt.s32.totalorder %s145, 31
        %s147 = scalar_select %p146, %s145, 31
        %s148 = smul.addr %s147, 8
        %s149 = scalar_lea.vmem %s1, %s148
        %s150 = smul.u32 16, %s19
        %s151 = smul.u32 16, %s19
        %p152 = scmp.lt.s32.totalorder %s151, 31
        %s153 = scalar_select %p152, %s151, 31
        %s154 = smul.addr %s153, 8
        %s155 = scalar_lea.vmem %s1, %s154
        %s156 = smul.u32 16, %s19
        %v157 = vld [vmem:[%s130] sm:$0xff]
        %v158 = vld [vmem:[%s130 + $0x8] sm:$0xff]
        %v159 = vld [vmem:[%s130 + $0x10] sm:$0xff]
        %v160 = vld [vmem:[%s130 + $0x18] sm:$0xff]
        %v161 = vld [vmem:[%s130 + $0x20] sm:$0xff]
        %v162 = vld [vmem:[%s130 + $0x28] sm:$0xff]
        %v163 = vld [vmem:[%s130 + $0x30] sm:$0xff]
        %v164 = vld [vmem:[%s130 + $0x38] sm:$0xff]
        %v165 = vld [vmem:[%s130 + $0x40] sm:$0xff]
        %v166 = vld [vmem:[%s130 + $0x48] sm:$0xff]
        %v167 = vld [vmem:[%s130 + $0x50] sm:$0xff]
        %v168 = vld [vmem:[%s130 + $0x58] sm:$0xff]
        %v169 = vld [vmem:[%s130 + $0x60] sm:$0xff]
        %v170 = vld [vmem:[%s130 + $0x68] sm:$0xff]
        %v171 = vld [vmem:[%s130 + $0x70] sm:$0xff]
        %v172 = vld [vmem:[%s130 + $0x78] sm:$0xff]
        %173 = vadd.xlane.f32.xlu0 %v157
        %v174 = vpop.xlane.xlu0 %173
        %175 = vadd.xlane.f32.xlu0 %v158
        %v176 = vpop.xlane.xlu0 %175
        %177 = vadd.xlane.f32.xlu0 %v159
        %v178 = vpop.xlane.xlu0 %177
        %179 = vadd.xlane.f32.xlu0 %v160
        %v180 = vpop.xlane.xlu0 %179
        %181 = vadd.xlane.f32.xlu0 %v161
        %v182 = vpop.xlane.xlu0 %181
        %183 = vadd.xlane.f32.xlu0 %v162
        %v184 = vpop.xlane.xlu0 %183
        %185 = vadd.xlane.f32.xlu0 %v163
        %v186 = vpop.xlane.xlu0 %185
        %187 = vadd.xlane.f32.xlu0 %v164
        %v188 = vpop.xlane.xlu0 %187
        %189 = vadd.xlane.f32.xlu0 %v165
        %v190 = vpop.xlane.xlu0 %189
        %191 = vadd.xlane.f32.xlu0 %v166
        %v192 = vpop.xlane.xlu0 %191
        %193 = vadd.xlane.f32.xlu0 %v167
        %v194 = vpop.xlane.xlu0 %193
        %195 = vadd.xlane.f32.xlu0 %v168
        %v196 = vpop.xlane.xlu0 %195
        %197 = vadd.xlane.f32.xlu0 %v169
        %v198 = vpop.xlane.xlu0 %197
        %199 = vadd.xlane.f32.xlu0 %v170
        %v200 = vpop.xlane.xlu0 %199
        %201 = vadd.xlane.f32.xlu0 %v171
        %v202 = vpop.xlane.xlu0 %201
        %203 = vadd.xlane.f32.xlu0 %v172
        %v204 = vpop.xlane.xlu0 %203
        %p205 = scmp.eq.s32.totalorder %s20, 0
        // Predicated region
        $region29: #{tpu_custom_call.1} parent=23 // pred_check
          %p206 = pneg %p205
        $region30: #{tpu_custom_call.1} parent=23 // pred_check_branch
          %208 = sbr.rel (%p206) target = $region32
        $region31: #{tpu_custom_call.1} parent=23 // pred_region
          %v209 = vadd.f32 %v174, 1.0
          %v210 = vadd.f32 %v176, 1.0
          %v211 = vadd.f32 %v178, 1.0
          %v212 = vadd.f32 %v180, 1.0
          %v213 = vadd.f32 %v182, 1.0
          %v214 = vadd.f32 %v184, 1.0
          %v215 = vadd.f32 %v186, 1.0
          %v216 = vadd.f32 %v188, 1.0
          %v217 = vadd.f32 %v190, 1.0
          %v218 = vadd.f32 %v192, 1.0
          %v219 = vadd.f32 %v194, 1.0
          %v220 = vadd.f32 %v196, 1.0
          %v221 = vadd.f32 %v198, 1.0
          %v222 = vadd.f32 %v200, 1.0
          %v223 = vadd.f32 %v202, 1.0
          %v224 = vadd.f32 %v204, 1.0
          %vm225 = vcmask 7168
          %226 = vst.msk [vmem:[%s155] sm:$0xff] %vm225, %v209
          %227 = vst.msk [vmem:[%s155 + $0x8] sm:$0xff] %vm225, %v210
          %228 = vst.msk [vmem:[%s155 + $0x10] sm:$0xff] %vm225, %v211
          %229 = vst.msk [vmem:[%s155 + $0x18] sm:$0xff] %vm225, %v212
          %230 = vst.msk [vmem:[%s155 + $0x20] sm:$0xff] %vm225, %v213
          %231 = vst.msk [vmem:[%s155 + $0x28] sm:$0xff] %vm225, %v214
          %232 = vst.msk [vmem:[%s155 + $0x30] sm:$0xff] %vm225, %v215
          %233 = vst.msk [vmem:[%s155 + $0x38] sm:$0xff] %vm225, %v216
          %234 = vst.msk [vmem:[%s155 + $0x40] sm:$0xff] %vm225, %v217
          %235 = vst.msk [vmem:[%s155 + $0x48] sm:$0xff] %vm225, %v218
          %236 = vst.msk [vmem:[%s155 + $0x50] sm:$0xff] %vm225, %v219
          %237 = vst.msk [vmem:[%s155 + $0x58] sm:$0xff] %vm225, %v220
          %238 = vst.msk [vmem:[%s155 + $0x60] sm:$0xff] %vm225, %v221
          %239 = vst.msk [vmem:[%s155 + $0x68] sm:$0xff] %vm225, %v222
          %240 = vst.msk [vmem:[%s155 + $0x70] sm:$0xff] %vm225, %v223
          %241 = vst.msk [vmem:[%s155 + $0x78] sm:$0xff] %vm225, %v224
        $region32: #{tpu_custom_call.1} parent=23 // pred_fallthru
          _
        %p242 = scmp.gt.s32.totalorder %s20, 0
        // Predicated region
        $region33: #{tpu_custom_call.1} parent=23 // pred_check
          %p243 = pneg %p242
        $region34: #{tpu_custom_call.1} parent=23 // pred_check_branch
          %245 = sbr.rel (%p243) target = $region36
        $region35: #{tpu_custom_call.1} parent=23 // pred_region
          %v246 = vld [vmem:[%s155] sm:$0xff]
          %v247 = vld [vmem:[%s155 + $0x8] sm:$0xff]
          %v248 = vld [vmem:[%s155 + $0x10] sm:$0xff]
          %v249 = vld [vmem:[%s155 + $0x18] sm:$0xff]
          %v250 = vld [vmem:[%s155 + $0x20] sm:$0xff]
          %v251 = vld [vmem:[%s155 + $0x28] sm:$0xff]
          %v252 = vld [vmem:[%s155 + $0x30] sm:$0xff]
          %v253 = vld [vmem:[%s155 + $0x38] sm:$0xff]
          %v254 = vld [vmem:[%s155 + $0x40] sm:$0xff]
          %v255 = vld [vmem:[%s155 + $0x48] sm:$0xff]
          %v256 = vld [vmem:[%s155 + $0x50] sm:$0xff]
          %v257 = vld [vmem:[%s155 + $0x58] sm:$0xff]
          %v258 = vld [vmem:[%s155 + $0x60] sm:$0xff]
          %v259 = vld [vmem:[%s155 + $0x68] sm:$0xff]
          %v260 = vld [vmem:[%s155 + $0x70] sm:$0xff]
          %v261 = vld [vmem:[%s155 + $0x78] sm:$0xff]
          %v262 = vadd.f32 %v246, %v174
          %v263 = vadd.f32 %v247, %v176
          %v264 = vadd.f32 %v248, %v178
          %v265 = vadd.f32 %v249, %v180
          %v266 = vadd.f32 %v250, %v182
          %v267 = vadd.f32 %v251, %v184
          %v268 = vadd.f32 %v252, %v186
          %v269 = vadd.f32 %v253, %v188
          %v270 = vadd.f32 %v254, %v190
          %v271 = vadd.f32 %v255, %v192
          %v272 = vadd.f32 %v256, %v194
          %v273 = vadd.f32 %v257, %v196
          %v274 = vadd.f32 %v258, %v198
          %v275 = vadd.f32 %v259, %v200
          %v276 = vadd.f32 %v260, %v202
          %v277 = vadd.f32 %v261, %v204
          %vm278 = vcmask 7168
          %279 = vst.msk [vmem:[%s155] sm:$0xff] %vm278, %v262
          %280 = vst.msk [vmem:[%s155 + $0x8] sm:$0xff] %vm278, %v263
          %281 = vst.msk [vmem:[%s155 + $0x10] sm:$0xff] %vm278, %v264
          %282 = vst.msk [vmem:[%s155 + $0x18] sm:$0xff] %vm278, %v265
          %283 = vst.msk [vmem:[%s155 + $0x20] sm:$0xff] %vm278, %v266
          %284 = vst.msk [vmem:[%s155 + $0x28] sm:$0xff] %vm278, %v267
          %285 = vst.msk [vmem:[%s155 + $0x30] sm:$0xff] %vm278, %v268
          %286 = vst.msk [vmem:[%s155 + $0x38] sm:$0xff] %vm278, %v269
          %287 = vst.msk [vmem:[%s155 + $0x40] sm:$0xff] %vm278, %v270
          %288 = vst.msk [vmem:[%s155 + $0x48] sm:$0xff] %vm278, %v271
          %289 = vst.msk [vmem:[%s155 + $0x50] sm:$0xff] %vm278, %v272
          %290 = vst.msk [vmem:[%s155 + $0x58] sm:$0xff] %vm278, %v273
          %291 = vst.msk [vmem:[%s155 + $0x60] sm:$0xff] %vm278, %v274
          %292 = vst.msk [vmem:[%s155 + $0x68] sm:$0xff] %vm278, %v275
          %293 = vst.msk [vmem:[%s155 + $0x70] sm:$0xff] %vm278, %v276
          %294 = vst.msk [vmem:[%s155 + $0x78] sm:$0xff] %vm278, %v277
        $region36: #{tpu_custom_call.1} parent=23 // pred_fallthru
          _
        %p295 = scmp.eq.s32.totalorder %s20, 1
        // Predicated region
        $region37: #{tpu_custom_call.1} parent=23 // pred_check
          %p296 = pneg %p295
        $region38: #{tpu_custom_call.1} parent=23 // pred_check_branch
          %298 = sbr.rel (%p296) target = $region40
        $region39: #{tpu_custom_call.1} parent=23 // pred_region
          %v299 = vld [vmem:[%s155] sm:$0xff]
          %v300 = vld [vmem:[%s155 + $0x8] sm:$0xff]
          %v301 = vld [vmem:[%s155 + $0x10] sm:$0xff]
          %v302 = vld [vmem:[%s155 + $0x18] sm:$0xff]
          %v303 = vld [vmem:[%s155 + $0x20] sm:$0xff]
          %v304 = vld [vmem:[%s155 + $0x28] sm:$0xff]
          %v305 = vld [vmem:[%s155 + $0x30] sm:$0xff]
          %v306 = vld [vmem:[%s155 + $0x38] sm:$0xff]
          %v307 = vld [vmem:[%s155 + $0x40] sm:$0xff]
          %v308 = vld [vmem:[%s155 + $0x48] sm:$0xff]
          %v309 = vld [vmem:[%s155 + $0x50] sm:$0xff]
          %v310 = vld [vmem:[%s155 + $0x58] sm:$0xff]
          %v311 = vld [vmem:[%s155 + $0x60] sm:$0xff]
          %v312 = vld [vmem:[%s155 + $0x68] sm:$0xff]
          %v313 = vld [vmem:[%s155 + $0x70] sm:$0xff]
          %v314 = vld [vmem:[%s155 + $0x78] sm:$0xff]
          %v315 = vrsqrt.pop %v299
          %v316 = vmul.f32 %v315, %v299
          %v317 = vmul.f32 %v316, %v315
          %v318 = vmul.f32 0.5, %v317
          %v319 = vsub.f32 1.5, %v318
          %v320 = vmul.f32 %v315, %v319
          %vm321 = vweird.f32 %v299
          %vm322 = vweird.f32 %v315
          %vm323 = vmor %vm321, %vm322
          %v324 = vsel %vm323, %v315, %v320
          %v325 = vrsqrt.pop %v300
          %v326 = vmul.f32 %v325, %v300
          %v327 = vmul.f32 %v326, %v325
          %v328 = vmul.f32 0.5, %v327
          %v329 = vsub.f32 1.5, %v328
          %v330 = vmul.f32 %v325, %v329
          %vm331 = vweird.f32 %v300
          %vm332 = vweird.f32 %v325
          %vm333 = vmor %vm331, %vm332
          %v334 = vsel %vm333, %v325, %v330
          %v335 = vrsqrt.pop %v301
          %v336 = vmul.f32 %v335, %v301
          %v337 = vmul.f32 %v336, %v335
          %v338 = vmul.f32 0.5, %v337
          %v339 = vsub.f32 1.5, %v338
          %v340 = vmul.f32 %v335, %v339
          %vm341 = vweird.f32 %v301
          %vm342 = vweird.f32 %v335
          %vm343 = vmor %vm341, %vm342
          %v344 = vsel %vm343, %v335, %v340
          %v345 = vrsqrt.pop %v302
          %v346 = vmul.f32 %v345, %v302
          %v347 = vmul.f32 %v346, %v345
          %v348 = vmul.f32 0.5, %v347
          %v349 = vsub.f32 1.5, %v348
          %v350 = vmul.f32 %v345, %v349
          %vm351 = vweird.f32 %v302
          %vm352 = vweird.f32 %v345
          %vm353 = vmor %vm351, %vm352
          %v354 = vsel %vm353, %v345, %v350
          %v355 = vrsqrt.pop %v303
          %v356 = vmul.f32 %v355, %v303
          %v357 = vmul.f32 %v356, %v355
          %v358 = vmul.f32 0.5, %v357
          %v359 = vsub.f32 1.5, %v358
          %v360 = vmul.f32 %v355, %v359
          %vm361 = vweird.f32 %v303
          %vm362 = vweird.f32 %v355
          %vm363 = vmor %vm361, %vm362
          %v364 = vsel %vm363, %v355, %v360
          %v365 = vrsqrt.pop %v304
          %v366 = vmul.f32 %v365, %v304
          %v367 = vmul.f32 %v366, %v365
          %v368 = vmul.f32 0.5, %v367
          %v369 = vsub.f32 1.5, %v368
          %v370 = vmul.f32 %v365, %v369
          %vm371 = vweird.f32 %v304
          %vm372 = vweird.f32 %v365
          %vm373 = vmor %vm371, %vm372
          %v374 = vsel %vm373, %v365, %v370
          %v375 = vrsqrt.pop %v305
          %v376 = vmul.f32 %v375, %v305
          %v377 = vmul.f32 %v376, %v375
          %v378 = vmul.f32 0.5, %v377
          %v379 = vsub.f32 1.5, %v378
          %v380 = vmul.f32 %v375, %v379
          %vm381 = vweird.f32 %v305
          %vm382 = vweird.f32 %v375
          %vm383 = vmor %vm381, %vm382
          %v384 = vsel %vm383, %v375, %v380
          %v385 = vrsqrt.pop %v306
          %v386 = vmul.f32 %v385, %v306
          %v387 = vmul.f32 %v386, %v385
          %v388 = vmul.f32 0.5, %v387
          %v389 = vsub.f32 1.5, %v388
          %v390 = vmul.f32 %v385, %v389
          %vm391 = vweird.f32 %v306
          %vm392 = vweird.f32 %v385
          %vm393 = vmor %vm391, %vm392
          %v394 = vsel %vm393, %v385, %v390
          %v395 = vrsqrt.pop %v307
          %v396 = vmul.f32 %v395, %v307
          %v397 = vmul.f32 %v396, %v395
          %v398 = vmul.f32 0.5, %v397
          %v399 = vsub.f32 1.5, %v398
          %v400 = vmul.f32 %v395, %v399
          %vm401 = vweird.f32 %v307
          %vm402 = vweird.f32 %v395
          %vm403 = vmor %vm401, %vm402
          %v404 = vsel %vm403, %v395, %v400
          %v405 = vrsqrt.pop %v308
          %v406 = vmul.f32 %v405, %v308
          %v407 = vmul.f32 %v406, %v405
          %v408 = vmul.f32 0.5, %v407
          %v409 = vsub.f32 1.5, %v408
          %v410 = vmul.f32 %v405, %v409
          %vm411 = vweird.f32 %v308
          %vm412 = vweird.f32 %v405
          %vm413 = vmor %vm411, %vm412
          %v414 = vsel %vm413, %v405, %v410
          %v415 = vrsqrt.pop %v309
          %v416 = vmul.f32 %v415, %v309
          %v417 = vmul.f32 %v416, %v415
          %v418 = vmul.f32 0.5, %v417
          %v419 = vsub.f32 1.5, %v418
          %v420 = vmul.f32 %v415, %v419
          %vm421 = vweird.f32 %v309
          %vm422 = vweird.f32 %v415
          %vm423 = vmor %vm421, %vm422
          %v424 = vsel %vm423, %v415, %v420
          %v425 = vrsqrt.pop %v310
          %v426 = vmul.f32 %v425, %v310
          %v427 = vmul.f32 %v426, %v425
          %v428 = vmul.f32 0.5, %v427
          %v429 = vsub.f32 1.5, %v428
          %v430 = vmul.f32 %v425, %v429
          %vm431 = vweird.f32 %v310
          %vm432 = vweird.f32 %v425
          %vm433 = vmor %vm431, %vm432
          %v434 = vsel %vm433, %v425, %v430
          %v435 = vrsqrt.pop %v311
          %v436 = vmul.f32 %v435, %v311
          %v437 = vmul.f32 %v436, %v435
          %v438 = vmul.f32 0.5, %v437
          %v439 = vsub.f32 1.5, %v438
          %v440 = vmul.f32 %v435, %v439
          %vm441 = vweird.f32 %v311
          %vm442 = vweird.f32 %v435
          %vm443 = vmor %vm441, %vm442
          %v444 = vsel %vm443, %v435, %v440
          %v445 = vrsqrt.pop %v312
          %v446 = vmul.f32 %v445, %v312
          %v447 = vmul.f32 %v446, %v445
          %v448 = vmul.f32 0.5, %v447
          %v449 = vsub.f32 1.5, %v448
          %v450 = vmul.f32 %v445, %v449
          %vm451 = vweird.f32 %v312
          %vm452 = vweird.f32 %v445
          %vm453 = vmor %vm451, %vm452
          %v454 = vsel %vm453, %v445, %v450
          %v455 = vrsqrt.pop %v313
          %v456 = vmul.f32 %v455, %v313
          %v457 = vmul.f32 %v456, %v455
          %v458 = vmul.f32 0.5, %v457
          %v459 = vsub.f32 1.5, %v458
          %v460 = vmul.f32 %v455, %v459
          %vm461 = vweird.f32 %v313
          %vm462 = vweird.f32 %v455
          %vm463 = vmor %vm461, %vm462
          %v464 = vsel %vm463, %v455, %v460
          %v465 = vrsqrt.pop %v314
          %v466 = vmul.f32 %v465, %v314
          %v467 = vmul.f32 %v466, %v465
          %v468 = vmul.f32 0.5, %v467
          %v469 = vsub.f32 1.5, %v468
          %v470 = vmul.f32 %v465, %v469
          %vm471 = vweird.f32 %v314
          %vm472 = vweird.f32 %v465
          %vm473 = vmor %vm471, %vm472
          %v474 = vsel %vm473, %v465, %v470
          %v475 = vand.u32 2147483647, %v324
          %v476 = vand.u32 2147483647, %v334
          %v477 = vand.u32 2147483647, %v344
          %v478 = vand.u32 2147483647, %v354
          %v479 = vand.u32 2147483647, %v364
          %v480 = vand.u32 2147483647, %v374
          %v481 = vand.u32 2147483647, %v384
          %v482 = vand.u32 2147483647, %v394
          %v483 = vand.u32 2147483647, %v404
          %v484 = vand.u32 2147483647, %v414
          %v485 = vand.u32 2147483647, %v424
          %v486 = vand.u32 2147483647, %v434
          %v487 = vand.u32 2147483647, %v444
          %v488 = vand.u32 2147483647, %v454
          %v489 = vand.u32 2147483647, %v464
          %v490 = vand.u32 2147483647, %v474
          %vm491 = vcmp.eq.f32.partialorder %v475, inf
          %vm492 = vcmp.eq.f32.partialorder %v476, inf
          %vm493 = vcmp.eq.f32.partialorder %v477, inf
          %vm494 = vcmp.eq.f32.partialorder %v478, inf
          %vm495 = vcmp.eq.f32.partialorder %v479, inf
          %vm496 = vcmp.eq.f32.partialorder %v480, inf
          %vm497 = vcmp.eq.f32.partialorder %v481, inf
          %vm498 = vcmp.eq.f32.partialorder %v482, inf
          %vm499 = vcmp.eq.f32.partialorder %v483, inf
          %vm500 = vcmp.eq.f32.partialorder %v484, inf
          %vm501 = vcmp.eq.f32.partialorder %v485, inf
          %vm502 = vcmp.eq.f32.partialorder %v486, inf
          %vm503 = vcmp.eq.f32.partialorder %v487, inf
          %vm504 = vcmp.eq.f32.partialorder %v488, inf
          %vm505 = vcmp.eq.f32.partialorder %v489, inf
          %vm506 = vcmp.eq.f32.partialorder %v490, inf
          %v507 = vsel %vm491, 0.0, %v324
          %v508 = vsel %vm492, 0.0, %v334
          %v509 = vsel %vm493, 0.0, %v344
          %v510 = vsel %vm494, 0.0, %v354
          %v511 = vsel %vm495, 0.0, %v364
          %v512 = vsel %vm496, 0.0, %v374
          %v513 = vsel %vm497, 0.0, %v384
          %v514 = vsel %vm498, 0.0, %v394
          %v515 = vsel %vm499, 0.0, %v404
          %v516 = vsel %vm500, 0.0, %v414
          %v517 = vsel %vm501, 0.0, %v424
          %v518 = vsel %vm502, 0.0, %v434
          %v519 = vsel %vm503, 0.0, %v444
          %v520 = vsel %vm504, 0.0, %v454
          %v521 = vsel %vm505, 0.0, %v464
          %v522 = vsel %vm506, 0.0, %v474
          %vm523 = vcmask 7168
          %524 = vst.msk [vmem:[%s155] sm:$0xff] %vm523, %v507
          %525 = vst.msk [vmem:[%s155 + $0x8] sm:$0xff] %vm523, %v508
          %526 = vst.msk [vmem:[%s155 + $0x10] sm:$0xff] %vm523, %v509
          %527 = vst.msk [vmem:[%s155 + $0x18] sm:$0xff] %vm523, %v510
          %528 = vst.msk [vmem:[%s155 + $0x20] sm:$0xff] %vm523, %v511
          %529 = vst.msk [vmem:[%s155 + $0x28] sm:$0xff] %vm523, %v512
          %530 = vst.msk [vmem:[%s155 + $0x30] sm:$0xff] %vm523, %v513
          %531 = vst.msk [vmem:[%s155 + $0x38] sm:$0xff] %vm523, %v514
          %532 = vst.msk [vmem:[%s155 + $0x40] sm:$0xff] %vm523, %v515
          %533 = vst.msk [vmem:[%s155 + $0x48] sm:$0xff] %vm523, %v516
          %534 = vst.msk [vmem:[%s155 + $0x50] sm:$0xff] %vm523, %v517
          %535 = vst.msk [vmem:[%s155 + $0x58] sm:$0xff] %vm523, %v518
          %536 = vst.msk [vmem:[%s155 + $0x60] sm:$0xff] %vm523, %v519
          %537 = vst.msk [vmem:[%s155 + $0x68] sm:$0xff] %vm523, %v520
          %538 = vst.msk [vmem:[%s155 + $0x70] sm:$0xff] %vm523, %v521
          %539 = vst.msk [vmem:[%s155 + $0x78] sm:$0xff] %vm523, %v522
        $region40: #{tpu_custom_call.1} parent=23 // pred_fallthru
          _
        %s540 = smul.u32 16, %s19
        %p541 = scmp.lt.s32.totalorder %s540, 31
        %s542 = scalar_select %p541, %s540, 31
        %s543 = smul.addr %s542, 8
        %s544 = scalar_lea.vmem %s1, %s543
        // Predicated region
        $region41: #{tpu_custom_call.1} parent=23 // pred_check
          %p545 = pneg %p73
        $region42: #{tpu_custom_call.1} parent=23 // pred_check_branch
          %547 = sbr.rel (%p545) target = $region44
        $region43: #{tpu_custom_call.1} parent=23 // pred_region
          %s548 = smul.u32 16, %s19
        $region44: #{tpu_custom_call.1} parent=23 // pred_fallthru
          _
      $region24: #{tpu_custom_call.1} parent=5 // pred_fallthru
        _
      %p549 = scmp.le.s32.totalorder 2, %s10
      // Predicated region
      $region45: #{tpu_custom_call.1} parent=5 // pred_check
        %p550 = pneg %p549
      $region46: #{tpu_custom_call.1} parent=5 // pred_check_branch
        %552 = sbr.rel (%p550) target = $region48
      $region47: #{tpu_custom_call.1} parent=5 // pred_region
        %s553 = ssub.s32 %s10, 2
        // Predicated region
        $region49: #{tpu_custom_call.1} parent=47 // pred_check
          %p554 = pneg %p79
        $region50: #{tpu_custom_call.1} parent=47 // pred_check_branch
          %556 = sbr.rel (%p554) target = $region52
        $region51: #{tpu_custom_call.1} parent=47 // pred_region
          %s557 = smul.u32 16, %s21
          %p558 = scmp.lt.s32.totalorder %s557, 31
          %s559 = scalar_select %p558, %s557, 31
          %s560 = smul.addr %s559, 8
          %s561 = scalar_lea.vmem %s1, %s560
        $region52: #{tpu_custom_call.1} parent=47 // pred_fallthru
          _
      $region48: #{tpu_custom_call.1} parent=5 // pred_fallthru
        _
    $region6: #{tpu_custom_call.1} parent=1 // loop_footer
      %s14 = sadd.s32 1, %s10
    $region7: #{tpu_custom_call.1} parent=1 // loop_footer_branch
      %9 = sbr.rel target = $region3
    $region8: #{tpu_custom_call.1} parent=1 // loop_exit
      _
    %562 = vsyncpa [#allocation3], 1
    %s563 = scalar_lea.sflag [#allocation3], 1
    %564 = vsyncpa %s563, 1

</llo_original>
